<compile_context>
chip_gen: v7x
topology: tpu7x:2x2x1
jax: 0.10.0
libtpu: 0.0.40
codegen_flags: <defaults>
</compile_context>

<pallas_src>
import math
import jax
import jax.numpy as jnp
from jax.experimental import pallas as pl
from jax.experimental.pallas import tpu as pltpu


# --------------------------------------------------------------------------
# Pallas kernel 1: four pyramid-stage 1x1 convs + folded-BN shift + ReLU,
# fused into one call (stages unrolled in-kernel, everything stays in VMEM).
# --------------------------------------------------------------------------
def _stage_kernel(x_ref, w_ref, shift_ref, o_ref):
    # x_ref: (S, Mmax, C) bf16, w_ref: (S, C, N) bf16,
    # shift_ref: (S, 1, N) f32, o_ref: (S, Mmax, N) f32
    for s in range(x_ref.shape[0]):
        z = jnp.dot(x_ref[s], w_ref[s], preferred_element_type=jnp.float32)
        o_ref[s] = jnp.maximum(z + shift_ref[s], 0.0)


def fused_stage_convs(x_stack, w_stack, shift_stack):
    """x_stack: (S, Mmax, C) bf16 -> (S, Mmax, N) f32 = ReLU(x @ w + shift)."""
    S, M, C = x_stack.shape
    N = w_stack.shape[-1]
    return pl.pallas_call(
        _stage_kernel,
        out_shape=jax.ShapeDtypeStruct((S, M, N), jnp.float32),
        grid=(1,),
        in_specs=[
            pl.BlockSpec((S, M, C), lambda i: (0, 0, 0)),
            pl.BlockSpec((S, C, N), lambda i: (0, 0, 0)),
            pl.BlockSpec((S, 1, N), lambda i: (0, 0, 0)),
        ],
        out_specs=pl.BlockSpec((S, M, N), lambda i: (0, 0, 0)),
    )(x_stack, w_stack.astype(jnp.bfloat16), shift_stack.astype(jnp.float32))


# --------------------------------------------------------------------------
# Pallas kernel 2: 3x3 conv (stride 1, SAME, bias=False) + folded-BN shift
# + ReLU.  The 9 taps are accumulated in-kernel -> no HBM im2col blow-up.
# --------------------------------------------------------------------------
def _make_conv3x3_kernel(H, W):
    def kernel(x_ref, w_ref, shift_ref, o_ref):
        cin = x_ref.shape[-1]
        n = w_ref.shape[-1]
        x = x_ref[0]                                        # (H+2, W+2, Cin) bf16
        acc = jnp.zeros((H * W, n), jnp.float32)
        for dy in range(3):
            for dx in range(3):
                win = x[dy:dy + H, dx:dx + W, :].reshape(H * W, cin)
                acc = acc + jnp.dot(win, w_ref[dy * 3 + dx],
                                    preferred_element_type=jnp.float32)
        z = jnp.maximum(acc + shift_ref[...], 0.0)
        o_ref[...] = z.reshape(1, H, W, n)
    return kernel


def conv3x3_bn_relu(x, w9, shift):
    """x: (B, H, W, Cin) NHWC.  w9: (9, Cin, N) with BN scale folded in.
    Returns ReLU(conv3x3(x, w) + shift), grid parallel over the batch."""
    B, H, W, Cin = x.shape
    N = w9.shape[-1]
    # only a 1-pixel spatial halo is materialized (bf16), never a 9x im2col
    xp = jnp.pad(x.astype(jnp.bfloat16), ((0, 0), (1, 1), (1, 1), (0, 0)))
    # TODO(synk): for large H*W, additionally tile rows (overlapping windows
    # via pl.Element index maps) instead of one full image per grid step.
    return pl.pallas_call(
        _make_conv3x3_kernel(H, W),
        out_shape=jax.ShapeDtypeStruct((B, H, W, N), jnp.float32),
        grid=(B,),
        in_specs=[
            pl.BlockSpec((1, H + 2, W + 2, Cin), lambda b: (b, 0, 0, 0)),
            pl.BlockSpec((9, Cin, N), lambda b: (0, 0, 0)),
            pl.BlockSpec((1, N), lambda b: (0, 0)),
        ],
        out_specs=pl.BlockSpec((1, H, W, N), lambda b: (b, 0, 0, 0)),
        compiler_params=pltpu.CompilerParams(
            dimension_semantics=("parallel",)),
    )(xp, w9.astype(jnp.bfloat16), shift.astype(jnp.float32))


# --------------------------------------------------------------------------
# Plain-JAX glue: adaptive average pool, bilinear (align_corners=True) resize
# --------------------------------------------------------------------------
def adaptive_avg_pool(x, s):
    """nn.AdaptiveAvgPool2d((s, s)) on NHWC input (general bin boundaries)."""
    B, H, W, C = x.shape
    rows = []
    for i in range(s):
        y0, y1 = (i * H) // s, ((i + 1) * H + s - 1) // s
        cols = []
        for j in range(s):
            x0, x1 = (j * W) // s, ((j + 1) * W + s - 1) // s
            cols.append(jnp.mean(x[:, y0:y1, x0:x1, :], axis=(1, 2)))
        rows.append(jnp.stack(cols, axis=1))                 # (B, s, C)
    return jnp.stack(rows, axis=1)                           # (B, s, s, C)


def bilinear_resize_ac(x, oh, ow):
    """Bilinear resize, align_corners=True (matches F.interpolate)."""
    B, H, W, C = x.shape
    sy = (H - 1) / (oh - 1) if oh > 1 else 0.0
    sx = (W - 1) / (ow - 1) if ow > 1 else 0.0
    ys = jnp.arange(oh, dtype=jnp.float32) * sy
    xs = jnp.arange(ow, dtype=jnp.float32) * sx
    y0 = jnp.floor(ys).astype(jnp.int32)
    x0 = jnp.floor(xs).astype(jnp.int32)
    y1 = jnp.minimum(y0 + 1, H - 1)
    x1 = jnp.minimum(x0 + 1, W - 1)
    wy = (ys - y0.astype(jnp.float32))[None, :, None, None]
    wx = (xs - x0.astype(jnp.float32))[None, None, :, None]
    top = x[:, y0, :, :]
    bot = x[:, y1, :, :]
    rows = top * (1.0 - wy) + bot * wy
    left = rows[:, :, x0, :]
    right = rows[:, :, x1, :]
    return left * (1.0 - wx) + right * wx


# --------------------------------------------------------------------------
# Deterministic parameter construction (BN eps = 1e-5, PyTorch default;
# BN is in inference form with running mean=0 / var=1; scale folded into W).
# --------------------------------------------------------------------------
def init_params(key, features, out_features, sizes=(1, 2, 3, 6), eps=1e-5):
    keys = iter(jax.random.split(key, 3 * len(sizes) + 3))
    stage_w, stage_shift = [], []
    for _ in sizes:
        w = jax.random.normal(next(keys), (features, out_features),
                              jnp.float32) / math.sqrt(features)
        gamma = 1.0 + 0.1 * jax.random.normal(next(keys), (out_features,), jnp.float32)
        beta = 0.1 * jax.random.normal(next(keys), (out_features,), jnp.float32)
        scale = gamma / jnp.sqrt(1.0 + eps)       # running var = 1, mean = 0
        stage_w.append(w * scale[None, :])        # fold BN scale into weight
        stage_shift.append(beta[None, :])         # shift = beta - mean*scale
    cin = features + len(sizes) * out_features
    w = jax.random.normal(next(keys), (3, 3, cin, out_features),
                          jnp.float32) / math.sqrt(9 * cin)
    gamma = 1.0 + 0.1 * jax.random.normal(next(keys), (out_features,), jnp.float32)
    beta = 0.1 * jax.random.normal(next(keys), (out_features,), jnp.float32)
    scale = gamma / jnp.sqrt(1.0 + eps)
    w_folded = (w * scale[None, None, None, :]).reshape(9, cin, out_features)
    return {
        "stage_w": jnp.stack(stage_w, 0).astype(jnp.bfloat16),     # (S, C, N)
        "stage_shift": jnp.stack(stage_shift, 0)[:, None, :],      # (S, 1, N) -> fixed below
        "bott_w": w_folded.astype(jnp.bfloat16),                   # (9, Cin, N)
        "bott_shift": beta[None, :],                               # (1, N)
    }


# --------------------------------------------------------------------------
# PPMModule forward
# --------------------------------------------------------------------------
def ppm_forward(feats, params, sizes=(1, 2, 3, 6)):
    B, H, W, C = feats.shape
    N = params["stage_w"].shape[-1]
    m_max = B * max(s * s for s in sizes)

    # one stacked slab for all four pooled inputs (tiny: <= B*36 rows each)
    pooled = []
    for s in sizes:
        p = adaptive_avg_pool(feats, s).reshape(B * s * s, C)
        pooled.append(jnp.pad(p, ((0, m_max - p.shape[0]), (0, 0))))
    x_stages = jnp.stack(pooled, 0).astype(jnp.bfloat16)           # (S, Mmax, C)

    y_stages = fused_stage_convs(x_stages, params["stage_w"],
                                 params["stage_shift"])            # (S, Mmax, N)

    branches = []
    for i, s in enumerate(sizes):
        y = y_stages[i, :B * s * s].reshape(B, s, s, N)
        branches.append(bilinear_resize_ac(y, H, W))
    branches.append(feats)
    cat = jnp.concatenate(branches, axis=-1)                       # (B, H, W, C + S*N)

    # bottleneck: conv3x3 (bias=False) + BN + ReLU; Dropout2d(0.1) = identity in eval.
    return conv3x3_bn_relu(cat, params["bott_w"], params["bott_shift"])


# --------------------------------------------------------------------------
if __name__ == "__main__":
    B, H, W = 2, 12, 12
    features, out_features = 32, 128        # small-shape stand-ins (ref default: 512)

    key = jax.random.PRNGKey(0)
    kp, kx = jax.random.split(key)
    params = init_params(kp, features, out_features)
    # stage_shift built as (S,1,1,N) above due to the extra [:, None, :]; squeeze to (S,1,N)
    params["stage_shift"] = params["stage_shift"].reshape(len((1, 2, 3, 6)), 1, out_features)

    # NHWC input (equivalent NCHW shape: (B, 32, 12, 12))
    feats = jax.random.normal(kx, (B, H, W, features), jnp.float32)

    # --- unit check: in-kernel 9-tap accumulation vs lax.conv_general_dilated ---
    kc, kw = jax.random.split(jax.random.PRNGKey(1))
    xc = jax.random.normal(kc, (1, 8, 8, 16), jnp.float32)
    wc = jax.random.normal(kw, (3, 3, 16, 128), jnp.float32) / math.sqrt(9 * 16)
    xb = xc.astype(jnp.bfloat16).astype(jnp.float32)
    wb = wc.astype(jnp.bfloat16).astype(jnp.float32)
    ref = jax.lax.conv_general_dilated(
        xb, wb, (1, 1), "SAME",
        dimension_numbers=("NHWC", "HWIO", "NHWC"),
        precision=jax.lax.Precision.HIGHEST)
    ref = jnp.maximum(ref, 0.0)
    got = conv3x3_bn_relu(xc, wc.reshape(9, 16, 128), jnp.zeros((1, 128), jnp.float32))
    assert bool(jnp.allclose(got, ref, atol=1e-2, rtol=1e-2)), \
        float(jnp.max(jnp.abs(got - ref)))

    out = jax.jit(ppm_forward)(feats, params)
    out = jax.block_until_ready(out)
    assert out.shape == (B, H, W, out_features), out.shape
    assert bool(jnp.all(jnp.isfinite(out)))
    print("KERNEL_OK")
</pallas_src>

<mosaic_0001>
module attributes {stable_mosaic.version = 11 : i64} {
  func.func @kernel(%arg0: i32, %arg1: memref<1x10x10x16xbf16, #tpu.memory_space<vmem>>, %arg2: memref<9x16x128xbf16, #tpu.memory_space<vmem>>, %arg3: memref<1x128xf32, #tpu.memory_space<vmem>>, %arg4: memref<1x8x8x128xf32, #tpu.memory_space<vmem>>) attributes {dimension_semantics = [#tpu.dimension_semantics<parallel>], iteration_bounds = array<i64: 1>, scalar_prefetch = 0 : i64, scratch_operands = 0 : i64, tpu.core_type = #tpu.core_type<tc>, window_params = [{transform_indices = @transform_0, window_bounds = array<i64: 1, 10, 10, 16>}, {pipeline_mode = #tpu.pipeline_mode<synchronous>, transform_indices = @transform_1, window_bounds = array<i64: 9, 16, 128>}, {pipeline_mode = #tpu.pipeline_mode<synchronous>, transform_indices = @transform_2, window_bounds = array<i64: 1, 128>}, {transform_indices = @transform_3, window_bounds = array<i64: 1, 8, 8, 128>}]} {
    %c0 = arith.constant 0 : index
    %c0_0 = arith.constant 0 : index
    %c0_1 = arith.constant 0 : index
    %c0_2 = arith.constant 0 : index
    %0 = vector.load %arg1[%c0, %c0_0, %c0_1, %c0_2] : memref<1x10x10x16xbf16, #tpu.memory_space<vmem>>, vector<1x10x10x16xbf16>
    %1 = vector.shape_cast %0 : vector<1x10x10x16xbf16> to vector<10x10x16xbf16>
    %cst = arith.constant 0.000000e+00 : f32
    %2 = vector.broadcast %cst : f32 to vector<64x128xf32>
    %3 = vector.extract_strided_slice %1 {offsets = [0, 0, 0], sizes = [8, 8, 16], strides = [1, 1, 1]} : vector<10x10x16xbf16> to vector<8x8x16xbf16>
    %4 = vector.shape_cast %3 : vector<8x8x16xbf16> to vector<64x16xbf16>
    %c0_3 = arith.constant 0 : index
    %c0_4 = arith.constant 0 : index
    %c0_5 = arith.constant 0 : index
    %5 = vector.load %arg2[%c0_3, %c0_4, %c0_5] : memref<9x16x128xbf16, #tpu.memory_space<vmem>>, vector<1x16x128xbf16>
    %6 = vector.shape_cast %5 : vector<1x16x128xbf16> to vector<16x128xbf16>
    %cst_6 = arith.constant dense<0.000000e+00> : vector<64x128xf32>
    %7 = tpu.matmul %4, %6, %cst_6 {dimension_numbers = #tpu.dot_dimension_numbers<[1], [0], [0], [1], [0, 0, 1, 1], [], []>} : vector<64x16xbf16>, vector<16x128xbf16>, vector<64x128xf32> -> vector<64x128xf32>
    %8 = arith.addf %2, %7 : vector<64x128xf32>
    %9 = vector.extract_strided_slice %1 {offsets = [0, 1, 0], sizes = [8, 8, 16], strides = [1, 1, 1]} : vector<10x10x16xbf16> to vector<8x8x16xbf16>
    %10 = vector.shape_cast %9 : vector<8x8x16xbf16> to vector<64x16xbf16>
    %c1 = arith.constant 1 : index
    %c0_7 = arith.constant 0 : index
    %c0_8 = arith.constant 0 : index
    %11 = vector.load %arg2[%c1, %c0_7, %c0_8] : memref<9x16x128xbf16, #tpu.memory_space<vmem>>, vector<1x16x128xbf16>
    %12 = vector.shape_cast %11 : vector<1x16x128xbf16> to vector<16x128xbf16>
    %cst_9 = arith.constant dense<0.000000e+00> : vector<64x128xf32>
    %13 = tpu.matmul %10, %12, %cst_9 {dimension_numbers = #tpu.dot_dimension_numbers<[1], [0], [0], [1], [0, 0, 1, 1], [], []>} : vector<64x16xbf16>, vector<16x128xbf16>, vector<64x128xf32> -> vector<64x128xf32>
    %14 = arith.addf %8, %13 : vector<64x128xf32>
    %15 = vector.extract_strided_slice %1 {offsets = [0, 2, 0], sizes = [8, 8, 16], strides = [1, 1, 1]} : vector<10x10x16xbf16> to vector<8x8x16xbf16>
    %16 = vector.shape_cast %15 : vector<8x8x16xbf16> to vector<64x16xbf16>
    %c2 = arith.constant 2 : index
    %c0_10 = arith.constant 0 : index
    %c0_11 = arith.constant 0 : index
    %17 = vector.load %arg2[%c2, %c0_10, %c0_11] : memref<9x16x128xbf16, #tpu.memory_space<vmem>>, vector<1x16x128xbf16>
    %18 = vector.shape_cast %17 : vector<1x16x128xbf16> to vector<16x128xbf16>
    %cst_12 = arith.constant dense<0.000000e+00> : vector<64x128xf32>
    %19 = tpu.matmul %16, %18, %cst_12 {dimension_numbers = #tpu.dot_dimension_numbers<[1], [0], [0], [1], [0, 0, 1, 1], [], []>} : vector<64x16xbf16>, vector<16x128xbf16>, vector<64x128xf32> -> vector<64x128xf32>
    %20 = arith.addf %14, %19 : vector<64x128xf32>
    %21 = vector.extract_strided_slice %1 {offsets = [1, 0, 0], sizes = [8, 8, 16], strides = [1, 1, 1]} : vector<10x10x16xbf16> to vector<8x8x16xbf16>
    %22 = vector.shape_cast %21 : vector<8x8x16xbf16> to vector<64x16xbf16>
    %c3 = arith.constant 3 : index
    %c0_13 = arith.constant 0 : index
    %c0_14 = arith.constant 0 : index
    %23 = vector.load %arg2[%c3, %c0_13, %c0_14] : memref<9x16x128xbf16, #tpu.memory_space<vmem>>, vector<1x16x128xbf16>
    %24 = vector.shape_cast %23 : vector<1x16x128xbf16> to vector<16x128xbf16>
    %cst_15 = arith.constant dense<0.000000e+00> : vector<64x128xf32>
    %25 = tpu.matmul %22, %24, %cst_15 {dimension_numbers = #tpu.dot_dimension_numbers<[1], [0], [0], [1], [0, 0, 1, 1], [], []>} : vector<64x16xbf16>, vector<16x128xbf16>, vector<64x128xf32> -> vector<64x128xf32>
    %26 = arith.addf %20, %25 : vector<64x128xf32>
    %27 = vector.extract_strided_slice %1 {offsets = [1, 1, 0], sizes = [8, 8, 16], strides = [1, 1, 1]} : vector<10x10x16xbf16> to vector<8x8x16xbf16>
    %28 = vector.shape_cast %27 : vector<8x8x16xbf16> to vector<64x16xbf16>
    %c4 = arith.constant 4 : index
    %c0_16 = arith.constant 0 : index
    %c0_17 = arith.constant 0 : index
    %29 = vector.load %arg2[%c4, %c0_16, %c0_17] : memref<9x16x128xbf16, #tpu.memory_space<vmem>>, vector<1x16x128xbf16>
    %30 = vector.shape_cast %29 : vector<1x16x128xbf16> to vector<16x128xbf16>
    %cst_18 = arith.constant dense<0.000000e+00> : vector<64x128xf32>
    %31 = tpu.matmul %28, %30, %cst_18 {dimension_numbers = #tpu.dot_dimension_numbers<[1], [0], [0], [1], [0, 0, 1, 1], [], []>} : vector<64x16xbf16>, vector<16x128xbf16>, vector<64x128xf32> -> vector<64x128xf32>
    %32 = arith.addf %26, %31 : vector<64x128xf32>
    %33 = vector.extract_strided_slice %1 {offsets = [1, 2, 0], sizes = [8, 8, 16], strides = [1, 1, 1]} : vector<10x10x16xbf16> to vector<8x8x16xbf16>
    %34 = vector.shape_cast %33 : vector<8x8x16xbf16> to vector<64x16xbf16>
    %c5 = arith.constant 5 : index
    %c0_19 = arith.constant 0 : index
    %c0_20 = arith.constant 0 : index
    %35 = vector.load %arg2[%c5, %c0_19, %c0_20] : memref<9x16x128xbf16, #tpu.memory_space<vmem>>, vector<1x16x128xbf16>
    %36 = vector.shape_cast %35 : vector<1x16x128xbf16> to vector<16x128xbf16>
    %cst_21 = arith.constant dense<0.000000e+00> : vector<64x128xf32>
    %37 = tpu.matmul %34, %36, %cst_21 {dimension_numbers = #tpu.dot_dimension_numbers<[1], [0], [0], [1], [0, 0, 1, 1], [], []>} : vector<64x16xbf16>, vector<16x128xbf16>, vector<64x128xf32> -> vector<64x128xf32>
    %38 = arith.addf %32, %37 : vector<64x128xf32>
    %39 = vector.extract_strided_slice %1 {offsets = [2, 0, 0], sizes = [8, 8, 16], strides = [1, 1, 1]} : vector<10x10x16xbf16> to vector<8x8x16xbf16>
    %40 = vector.shape_cast %39 : vector<8x8x16xbf16> to vector<64x16xbf16>
    %c6 = arith.constant 6 : index
    %c0_22 = arith.constant 0 : index
    %c0_23 = arith.constant 0 : index
    %41 = vector.load %arg2[%c6, %c0_22, %c0_23] : memref<9x16x128xbf16, #tpu.memory_space<vmem>>, vector<1x16x128xbf16>
    %42 = vector.shape_cast %41 : vector<1x16x128xbf16> to vector<16x128xbf16>
    %cst_24 = arith.constant dense<0.000000e+00> : vector<64x128xf32>
    %43 = tpu.matmul %40, %42, %cst_24 {dimension_numbers = #tpu.dot_dimension_numbers<[1], [0], [0], [1], [0, 0, 1, 1], [], []>} : vector<64x16xbf16>, vector<16x128xbf16>, vector<64x128xf32> -> vector<64x128xf32>
    %44 = arith.addf %38, %43 : vector<64x128xf32>
    %45 = vector.extract_strided_slice %1 {offsets = [2, 1, 0], sizes = [8, 8, 16], strides = [1, 1, 1]} : vector<10x10x16xbf16> to vector<8x8x16xbf16>
    %46 = vector.shape_cast %45 : vector<8x8x16xbf16> to vector<64x16xbf16>
    %c7 = arith.constant 7 : index
    %c0_25 = arith.constant 0 : index
    %c0_26 = arith.constant 0 : index
    %47 = vector.load %arg2[%c7, %c0_25, %c0_26] : memref<9x16x128xbf16, #tpu.memory_space<vmem>>, vector<1x16x128xbf16>
    %48 = vector.shape_cast %47 : vector<1x16x128xbf16> to vector<16x128xbf16>
    %cst_27 = arith.constant dense<0.000000e+00> : vector<64x128xf32>
    %49 = tpu.matmul %46, %48, %cst_27 {dimension_numbers = #tpu.dot_dimension_numbers<[1], [0], [0], [1], [0, 0, 1, 1], [], []>} : vector<64x16xbf16>, vector<16x128xbf16>, vector<64x128xf32> -> vector<64x128xf32>
    %50 = arith.addf %44, %49 : vector<64x128xf32>
    %51 = vector.extract_strided_slice %1 {offsets = [2, 2, 0], sizes = [8, 8, 16], strides = [1, 1, 1]} : vector<10x10x16xbf16> to vector<8x8x16xbf16>
    %52 = vector.shape_cast %51 : vector<8x8x16xbf16> to vector<64x16xbf16>
    %c8 = arith.constant 8 : index
    %c0_28 = arith.constant 0 : index
    %c0_29 = arith.constant 0 : index
    %53 = vector.load %arg2[%c8, %c0_28, %c0_29] : memref<9x16x128xbf16, #tpu.memory_space<vmem>>, vector<1x16x128xbf16>
    %54 = vector.shape_cast %53 : vector<1x16x128xbf16> to vector<16x128xbf16>
    %cst_30 = arith.constant dense<0.000000e+00> : vector<64x128xf32>
    %55 = tpu.matmul %52, %54, %cst_30 {dimension_numbers = #tpu.dot_dimension_numbers<[1], [0], [0], [1], [0, 0, 1, 1], [], []>} : vector<64x16xbf16>, vector<16x128xbf16>, vector<64x128xf32> -> vector<64x128xf32>
    %56 = arith.addf %50, %55 : vector<64x128xf32>
    %c0_31 = arith.constant 0 : index
    %c0_32 = arith.constant 0 : index
    %57 = vector.load %arg3[%c0_31, %c0_32] : memref<1x128xf32, #tpu.memory_space<vmem>>, vector<1x128xf32>
    %58 = vector.broadcast %57 : vector<1x128xf32> to vector<64x128xf32>
    %59 = arith.addf %56, %58 : vector<64x128xf32>
    %cst_33 = arith.constant 0.000000e+00 : f32
    %60 = vector.broadcast %cst_33 : f32 to vector<64x128xf32>
    %61 = arith.maximumf %59, %60 : vector<64x128xf32>
    %62 = vector.shape_cast %61 : vector<64x128xf32> to vector<1x8x8x128xf32>
    %c0_34 = arith.constant 0 : index
    %c0_35 = arith.constant 0 : index
    %c0_36 = arith.constant 0 : index
    %c0_37 = arith.constant 0 : index
    %63 = vector.load %arg4[%c0_34, %c0_35, %c0_36, %c0_37] : memref<1x8x8x128xf32, #tpu.memory_space<vmem>>, vector<1x8x8x128xf32>
    tpu.vector_store %arg4[%c0_34, %c0_35, %c0_36, %c0_37], %62 {strides = array<i32>} : memref<1x8x8x128xf32, #tpu.memory_space<vmem>>, vector<1x8x8x128xf32>,
    return
  }
  func.func @transform_0(%arg0: i32) -> (i32, i32, i32, i32) {
    %c0_i32 = arith.constant 0 : i32
    %c0_i32_0 = arith.constant 0 : i32
    %c0_i32_1 = arith.constant 0 : i32
    %c0_i32_2 = arith.constant 0 : i32
    return %arg0, %c0_i32, %c0_i32_0, %c0_i32_1 : i32, i32, i32, i32
  }
  func.func @transform_1(%arg0: i32) -> (i32, i32, i32) {
    %c0_i32 = arith.constant 0 : i32
    %c0_i32_0 = arith.constant 0 : i32
    %c0_i32_1 = arith.constant 0 : i32
    %c0_i32_2 = arith.constant 0 : i32
    return %c0_i32, %c0_i32_0, %c0_i32_1 : i32, i32, i32
  }
  func.func @transform_2(%arg0: i32) -> (i32, i32) {
    %c0_i32 = arith.constant 0 : i32
    %c0_i32_0 = arith.constant 0 : i32
    %c0_i32_1 = arith.constant 0 : i32
    return %c0_i32, %c0_i32_0 : i32, i32
  }
  func.func @transform_3(%arg0: i32) -> (i32, i32, i32, i32) {
    %c0_i32 = arith.constant 0 : i32
    %c0_i32_0 = arith.constant 0 : i32
    %c0_i32_1 = arith.constant 0 : i32
    %c0_i32_2 = arith.constant 0 : i32
    return %arg0, %c0_i32, %c0_i32_0, %c0_i32_1 : i32, i32, i32, i32
  }
}

</mosaic_0001>

<llo_original>
// kernel: tpu_custom_call.1
$region0: #{tpu_custom_call.1}
  #allocation0 [shape = 'u32[]', space=smem, size = 0x4, offset = 0x4, fixed_abs, tag = 'smem constant byte address 0x4 - core index']
  #allocation1 [shape = 'u32[144,128]{1,0:T(1,128)}', space=vmem, size = 0x12000, scoped, tag = 'internal scratch']
  %s0 = inlined_call_operand.hbm [shape: bf16[1,10,10,16], index: 0, kind: input, shape index: {}]
  %s1 = inlined_call_operand.hbm [shape: bf16[9,16,128], index: 1, kind: input, shape index: {}]
  %s2 = inlined_call_operand.vmem [shape: f32[1,128], index: 2, kind: input, shape index: {}]
  %s3 = inlined_call_operand.hbm [shape: f32[1,8,8,128], index: 3, kind: output, shape index: {}]
  %s4 = sld [smem:[#allocation0]]
  $region30: #{tpu_custom_call.1} parent=0
    _
  %s6 = ssub.s32 1, %s4
  %s7 = scalar_select 0, %s6, %s4
  $region1: #{tpu_custom_call.1} parent=0
    #allocation2 [shape = 'u8[40960]{0}', space=vmem, size = 0xa000, scoped, tag = 'input window, operand 0, single buffered']
    #allocation3 [shape = 's32[1]{0}', space=sflag, size = 0x4, scoped, tag = 'scoped memory for tpu_custom_call.1']
    #allocation4 [shape = 's32[1]{0}', space=sflag, size = 0x4, scoped, tag = 'scoped memory for tpu_custom_call.1']
    #allocation5 [shape = 'u8[36864]{0}', space=vmem, size = 0x9000, scoped, tag = 'input window, operand 1, single buffered']
    #allocation6 [shape = 's32[1]{0}', space=sflag, size = 0x4, scoped, tag = 'scoped memory for tpu_custom_call.1']
    #allocation7 [shape = 'u8[32768]{0}', space=vmem, size = 0x8000, scoped, tag = 'output window, operand 0, single buffered']
    %8 = vsyncpa [#allocation3], 0
    %9 = vsyncpa [#allocation6], 0
    %10 = vsyncpa [#allocation4], 0
    // Predicated region
    $region2: #{tpu_custom_call.1} parent=1 // pred_check
      _
    $region3: #{tpu_custom_call.1} parent=1 // pred_check_branch
      %12 = sbr.rel (0) target = $region5
    $region4: #{tpu_custom_call.1} parent=1 // pred_region
      %s14 = ssub.s32 1280, 1280
      %15 = vsyncadd [#allocation3], %s14
      %s16 = sshll.u32 [#allocation2], 4
      %s17 = int_to_ptr.vmem [resolvable:$true] %s16
      %22 = dma.hbm_to_vmem [thread:$0]  %s0, 1280, %s17, [#allocation3], 64, 64, 4
    $region5: #{tpu_custom_call.1} parent=1 // pred_fallthru
      _
    // Predicated region
    $region6: #{tpu_custom_call.1} parent=1 // pred_check
      _
    $region7: #{tpu_custom_call.1} parent=1 // pred_check_branch
      %24 = sbr.rel (0) target = $region9
    $region8: #{tpu_custom_call.1} parent=1 // pred_region
      %s26 = ssub.s32 1152, 1152
      %27 = vsyncadd [#allocation6], %s26
      %s28 = sshll.u32 [#allocation5], 4
      %s29 = int_to_ptr.vmem [resolvable:$true] %s28
      %34 = dma.hbm_to_vmem [thread:$0]  %s1, 1152, %s29, [#allocation6], 64, 64, 4
    $region9: #{tpu_custom_call.1} parent=1 // pred_fallthru
      _
    // Predicated region
    $region10: #{tpu_custom_call.1} parent=1 // pred_check
      _
    $region11: #{tpu_custom_call.1} parent=1 // pred_check_branch
      %36 = sbr.rel (0) target = $region13
    $region12: #{tpu_custom_call.1} parent=1 // pred_region
      _
    $region13: #{tpu_custom_call.1} parent=1 // pred_fallthru
      _
    // Predicated region
    $region14: #{tpu_custom_call.1} parent=1 // pred_check
      _
    $region15: #{tpu_custom_call.1} parent=1 // pred_check_branch
      %38 = sbr.rel (0) target = $region17
    $region16: #{tpu_custom_call.1} parent=1 // pred_region
      %39 = dma.done [#allocation3], 1280
    $region17: #{tpu_custom_call.1} parent=1 // pred_fallthru
      _
    // Predicated region
    $region18: #{tpu_custom_call.1} parent=1 // pred_check
      _
    $region19: #{tpu_custom_call.1} parent=1 // pred_check_branch
      %41 = sbr.rel (0) target = $region21
    $region20: #{tpu_custom_call.1} parent=1 // pred_region
      %42 = dma.done [#allocation6], 1152
    $region21: #{tpu_custom_call.1} parent=1 // pred_fallthru
      _
    %v44 = vld [vmem:[#allocation2] sm:$0xf]
    %v45 = vld [vmem:[#allocation2 + $0x4] sm:$0x1]
    %v46 = vld [vmem:[#allocation2 + $0x8] sm:$0xf]
    %v47 = vld [vmem:[#allocation2 + $0xc] sm:$0x1]
    %v48 = vld [vmem:[#allocation2 + $0x10] sm:$0xf]
    %v49 = vld [vmem:[#allocation2 + $0x14] sm:$0x1]
    %v50 = vld [vmem:[#allocation2 + $0x18] sm:$0xf]
    %v51 = vld [vmem:[#allocation2 + $0x1c] sm:$0x1]
    %v52 = vld [vmem:[#allocation2 + $0x20] sm:$0xf]
    %v53 = vld [vmem:[#allocation2 + $0x24] sm:$0x1]
    %v54 = vld [vmem:[#allocation2 + $0x28] sm:$0xf]
    %v55 = vld [vmem:[#allocation2 + $0x2c] sm:$0x1]
    %v56 = vld [vmem:[#allocation2 + $0x30] sm:$0xf]
    %v57 = vld [vmem:[#allocation2 + $0x34] sm:$0x1]
    %v58 = vld [vmem:[#allocation2 + $0x38] sm:$0xf]
    %v59 = vld [vmem:[#allocation2 + $0x3c] sm:$0x1]
    %v60 = vld [vmem:[#allocation2 + $0x40] sm:$0xf]
    %v61 = vld [vmem:[#allocation2 + $0x44] sm:$0x1]
    %v62 = vld [vmem:[#allocation2 + $0x48] sm:$0xf]
    %v63 = vld [vmem:[#allocation2 + $0x4c] sm:$0x1]
    %v64 = vld [vmem:[#allocation5] sm:$0xf]
    %v65 = vld [vmem:[#allocation5 + $0x4] sm:$0xf]
    %vm66 = vsmask.f32 3328
    %vm67 = vsmask.f32 7440
    %vm68 = vmor %vm66, %vm67
    %v70 = vshrl.u32 %v44, 16
    %v72 = vrot.slane %v70, 4
    %v73 = vshll.u32 %v44, 16
    %v75 = vrot.slane %v73, 5
    %v76 = vor.u32 %v72, %v75
    %v77 = vrot.slane %v76, 4
    %v79 = vshll.u32 %v45, 16
    %v81 = vrot.slane %v79, 5
    %v82 = vsel %vm68, %v77, %v81
    %v84 = vshrl.u32 %v46, 16
    %v86 = vrot.slane %v84, 4
    %v87 = vshll.u32 %v46, 16
    %v89 = vrot.slane %v87, 5
    %v90 = vor.u32 %v86, %v89
    %v91 = vrot.slane %v90, 4
    %v93 = vshll.u32 %v47, 16
    %v95 = vrot.slane %v93, 5
    %v96 = vsel %vm68, %v91, %v95
    %v98 = vshrl.u32 %v48, 16
    %v100 = vrot.slane %v98, 4
    %v101 = vshll.u32 %v48, 16
    %v103 = vrot.slane %v101, 5
    %v104 = vor.u32 %v100, %v103
    %v105 = vrot.slane %v104, 4
    %v107 = vshll.u32 %v49, 16
    %v109 = vrot.slane %v107, 5
    %v110 = vsel %vm68, %v105, %v109
    %v112 = vshrl.u32 %v50, 16
    %v114 = vrot.slane %v112, 4
    %v115 = vshll.u32 %v50, 16
    %v117 = vrot.slane %v115, 5
    %v118 = vor.u32 %v114, %v117
    %v119 = vrot.slane %v118, 4
    %v121 = vshll.u32 %v51, 16
    %v123 = vrot.slane %v121, 5
    %v124 = vsel %vm68, %v119, %v123
    %v126 = vshrl.u32 %v52, 16
    %v128 = vrot.slane %v126, 4
    %v129 = vshll.u32 %v52, 16
    %v131 = vrot.slane %v129, 5
    %v132 = vor.u32 %v128, %v131
    %v133 = vrot.slane %v132, 4
    %v135 = vshll.u32 %v53, 16
    %v137 = vrot.slane %v135, 5
    %v138 = vsel %vm68, %v133, %v137
    %v140 = vshrl.u32 %v54, 16
    %v142 = vrot.slane %v140, 4
    %v143 = vshll.u32 %v54, 16
    %v145 = vrot.slane %v143, 5
    %v146 = vor.u32 %v142, %v145
    %v147 = vrot.slane %v146, 4
    %v149 = vshll.u32 %v55, 16
    %v151 = vrot.slane %v149, 5
    %v152 = vsel %vm68, %v147, %v151
    %v154 = vshrl.u32 %v56, 16
    %v156 = vrot.slane %v154, 4
    %v157 = vshll.u32 %v56, 16
    %v159 = vrot.slane %v157, 5
    %v160 = vor.u32 %v156, %v159
    %v161 = vrot.slane %v160, 4
    %v163 = vshll.u32 %v57, 16
    %v165 = vrot.slane %v163, 5
    %v166 = vsel %vm68, %v161, %v165
    %v168 = vshrl.u32 %v58, 16
    %v170 = vrot.slane %v168, 4
    %v171 = vshll.u32 %v58, 16
    %v173 = vrot.slane %v171, 5
    %v174 = vor.u32 %v170, %v173
    %v175 = vrot.slane %v174, 4
    %v177 = vshll.u32 %v59, 16
    %v179 = vrot.slane %v177, 5
    %v180 = vsel %vm68, %v175, %v179
    %s181 = scalar_lea.vmem [#allocation5], 8
    %v182 = vld [vmem:[%s181] sm:$0xf]
    %v183 = vld [vmem:[%s181 + $0x4] sm:$0xf]
    %v184 = vunpack.c.l.b16 %v82
    %v185 = vunpack.c.l.b16 %v96
    %v186 = vunpack.c.l.b16 %v110
    %v187 = vunpack.c.l.b16 %v124
    %v188 = vunpack.c.l.b16 %v138
    %v189 = vunpack.c.l.b16 %v152
    %v190 = vunpack.c.l.b16 %v166
    %v191 = vunpack.c.l.b16 %v180
    %v192 = vpack.c.b16 %v185, %v184
    %v193 = vpack.c.b16 %v187, %v186
    %v194 = vpack.c.b16 %v189, %v188
    %v195 = vpack.c.b16 %v191, %v190
    %v198 = vunpack.c.l.b16 %v182
    %v199 = vunpack.c.l.b16 %v183
    %v200 = vpack.c.b16 %v199, %v198
    %vm202 = vcmask 130048
    %v204 = vsel %vm202, %v192, 0
    %v207 = vsel %vm202, %v193, 0
    %v210 = vsel %vm202, %v194, 0
    %v213 = vsel %vm202, %v195, 0
    %215 = vmatprep.subr.bf16.mxu0 0
    %216 = vmatpush1.bf16.msra.mxu0 %v200
    %217 = vmatprep.subr.bf16.mxu0 0
    %218 = vmatpush1.bf16.msra.mxu0 0
    %219 = vmatprep.subr.bf16.mxu0 0
    %220 = vmatpush1.bf16.msra.mxu0 0
    %221 = vmatprep.subr.bf16.mxu0 0
    %222 = vmatpush1.bf16.msra.mxu0 0
    %223 = vmatprep.subr.bf16.mxu0 0
    %224 = vmatpush1.bf16.msra.mxu0 0
    %225 = vmatprep.subr.bf16.mxu0 0
    %226 = vmatpush1.bf16.msra.mxu0 0
    %227 = vmatprep.subr.bf16.mxu0 0
    %228 = vmatpush1.bf16.msra.mxu0 0
    %229 = vmatprep.subr.bf16.mxu0 0
    %230 = vmatpush1.bf16.msra.mxu0 0
    %231 = vmatprep.subr.bf16.mxu0 0
    %232 = vmatpush1.bf16.msra.mxu0 0
    %233 = vmatprep.subr.bf16.mxu0 0
    %234 = vmatpush1.bf16.msra.mxu0 0
    %235 = vmatprep.subr.bf16.mxu0 0
    %236 = vmatpush1.bf16.msra.mxu0 0
    %237 = vmatprep.subr.bf16.mxu0 0
    %238 = vmatpush1.bf16.msra.mxu0 0
    %239 = vmatprep.subr.bf16.mxu0 0
    %240 = vmatpush1.bf16.msra.mxu0 0
    %241 = vmatprep.subr.bf16.mxu0 0
    %242 = vmatpush1.bf16.msra.mxu0 0
    %243 = vmatprep.subr.bf16.mxu0 0
    %244 = vmatpush1.bf16.msra.mxu0 0
    %245 = vmatprep.subr.bf16.mxu0 0
    %246 = vmatpush1.bf16.msra.mxu0 0
    %247 = vmatprep.mubr.bf16.mxu0 0
    %248 = vmatmul.mubr.bf16.gmra.mrb[0].mxu0 %v204
    %v249 = vpop.f32.mrb[0].mxu0
    %v250 = vadd.f32 0.0, %v249
    %v251 = vpop.f32.mrb[0].mxu0
    %v252 = vpop.f32.mrb[0].mxu0
    %v253 = vadd.f32 0.0, %v252
    %v254 = vpop.f32.mrb[0].mxu0
    %255 = vmatprep.mubr.bf16.mxu0 0
    %256 = vmatmul.mubr.bf16.gmra.mrb[0].mxu0 %v207
    %v257 = vpop.f32.mrb[0].mxu0
    %v258 = vadd.f32 0.0, %v257
    %v259 = vpop.f32.mrb[0].mxu0
    %v260 = vpop.f32.mrb[0].mxu0
    %v261 = vadd.f32 0.0, %v260
    %v262 = vpop.f32.mrb[0].mxu0
    %263 = vmatprep.mubr.bf16.mxu0 0
    %264 = vmatmul.mubr.bf16.gmra.mrb[0].mxu0 %v210
    %v265 = vpop.f32.mrb[0].mxu0
    %v266 = vadd.f32 0.0, %v265
    %v267 = vpop.f32.mrb[0].mxu0
    %v268 = vpop.f32.mrb[0].mxu0
    %v269 = vadd.f32 0.0, %v268
    %v270 = vpop.f32.mrb[0].mxu0
    %271 = vmatprep.mubr.bf16.mxu0 0
    %272 = vmatmul.mubr.bf16.gmra.mrb[0].mxu0 %v213
    %v273 = vpop.f32.mrb[0].mxu0
    %v274 = vadd.f32 0.0, %v273
    %v275 = vpop.f32.mrb[0].mxu0
    %v276 = vpop.f32.mrb[0].mxu0
    %v277 = vadd.f32 0.0, %v276
    %v278 = vpop.f32.mrb[0].mxu0
    %279 = vdwg.mxu0
    %v288 = vunpack.c.l.b16 %v44
    %v289 = vunpack.c.l.b16 %v46
    %v290 = vunpack.c.l.b16 %v48
    %v291 = vunpack.c.l.b16 %v50
    %v292 = vunpack.c.l.b16 %v52
    %v293 = vunpack.c.l.b16 %v54
    %v294 = vunpack.c.l.b16 %v56
    %v295 = vunpack.c.l.b16 %v58
    %v296 = vpack.c.b16 %v289, %v288
    %v297 = vpack.c.b16 %v291, %v290
    %v298 = vpack.c.b16 %v293, %v292
    %v299 = vpack.c.b16 %v295, %v294
    %v302 = vunpack.c.l.b16 %v64
    %v303 = vunpack.c.l.b16 %v65
    %v304 = vpack.c.b16 %v303, %v302
    %v307 = vsel %vm202, %v296, 0
    %v310 = vsel %vm202, %v297, 0
    %v313 = vsel %vm202, %v298, 0
    %v316 = vsel %vm202, %v299, 0
    %318 = vmatprep.subr.bf16.mxu0 0
    %319 = vmatpush1.bf16.msra.mxu0 %v304
    %320 = vmatprep.subr.bf16.mxu0 0
    %321 = vmatpush1.bf16.msra.mxu0 0
    %322 = vmatprep.subr.bf16.mxu0 0
    %323 = vmatpush1.bf16.msra.mxu0 0
    %324 = vmatprep.subr.bf16.mxu0 0
    %325 = vmatpush1.bf16.msra.mxu0 0
    %326 = vmatprep.subr.bf16.mxu0 0
    %327 = vmatpush1.bf16.msra.mxu0 0
    %328 = vmatprep.subr.bf16.mxu0 0
    %329 = vmatpush1.bf16.msra.mxu0 0
    %330 = vmatprep.subr.bf16.mxu0 0
    %331 = vmatpush1.bf16.msra.mxu0 0
    %332 = vmatprep.subr.bf16.mxu0 0
    %333 = vmatpush1.bf16.msra.mxu0 0
    %334 = vmatprep.subr.bf16.mxu0 0
    %335 = vmatpush1.bf16.msra.mxu0 0
    %336 = vmatprep.subr.bf16.mxu0 0
    %337 = vmatpush1.bf16.msra.mxu0 0
    %338 = vmatprep.subr.bf16.mxu0 0
    %339 = vmatpush1.bf16.msra.mxu0 0
    %340 = vmatprep.subr.bf16.mxu0 0
    %341 = vmatpush1.bf16.msra.mxu0 0
    %342 = vmatprep.subr.bf16.mxu0 0
    %343 = vmatpush1.bf16.msra.mxu0 0
    %344 = vmatprep.subr.bf16.mxu0 0
    %345 = vmatpush1.bf16.msra.mxu0 0
    %346 = vmatprep.subr.bf16.mxu0 0
    %347 = vmatpush1.bf16.msra.mxu0 0
    %348 = vmatprep.subr.bf16.mxu0 0
    %349 = vmatpush1.bf16.msra.mxu0 0
    %350 = vmatprep.mubr.bf16.mxu0 0
    %351 = vmatmul.mubr.bf16.gmra.mrb[0].mxu0 %v307
    %v352 = vpop.f32.mrb[0].mxu0
    %v353 = vadd.f32 %v250, %v352
    %v354 = vpop.f32.mrb[0].mxu0
    %v355 = vpop.f32.mrb[0].mxu0
    %v356 = vadd.f32 %v253, %v355
    %v357 = vpop.f32.mrb[0].mxu0
    %358 = vmatprep.mubr.bf16.mxu0 0
    %359 = vmatmul.mubr.bf16.gmra.mrb[0].mxu0 %v310
    %v360 = vpop.f32.mrb[0].mxu0
    %v361 = vadd.f32 %v258, %v360
    %v362 = vpop.f32.mrb[0].mxu0
    %v363 = vpop.f32.mrb[0].mxu0
    %v364 = vadd.f32 %v261, %v363
    %v365 = vpop.f32.mrb[0].mxu0
    %366 = vmatprep.mubr.bf16.mxu0 0
    %367 = vmatmul.mubr.bf16.gmra.mrb[0].mxu0 %v313
    %v368 = vpop.f32.mrb[0].mxu0
    %v369 = vadd.f32 %v266, %v368
    %v370 = vpop.f32.mrb[0].mxu0
    %v371 = vpop.f32.mrb[0].mxu0
    %v372 = vadd.f32 %v269, %v371
    %v373 = vpop.f32.mrb[0].mxu0
    %374 = vmatprep.mubr.bf16.mxu0 0
    %375 = vmatmul.mubr.bf16.gmra.mrb[0].mxu0 %v316
    %v376 = vpop.f32.mrb[0].mxu0
    %v377 = vadd.f32 %v274, %v376
    %v378 = vpop.f32.mrb[0].mxu0
    %v379 = vpop.f32.mrb[0].mxu0
    %v380 = vadd.f32 %v277, %v379
    %v381 = vpop.f32.mrb[0].mxu0
    %382 = vdwg.mxu0
    %vm391 = vcmask 1042432
    %vm392 = vcmask 1046532
    %vm393 = vmor %vm391, %vm392
    %v394 = vrot.slane %v44, 5
    %v395 = vrot.slane %v394, 4
    %v396 = vrot.slane %v45, 5
    %v397 = vsel %vm393, %v395, %v396
    %v398 = vrot.slane %v46, 5
    %v399 = vrot.slane %v398, 4
    %v400 = vrot.slane %v47, 5
    %v401 = vsel %vm393, %v399, %v400
    %v402 = vrot.slane %v48, 5
    %v403 = vrot.slane %v402, 4
    %v404 = vrot.slane %v49, 5
    %v405 = vsel %vm393, %v403, %v404
    %v406 = vrot.slane %v50, 5
    %v407 = vrot.slane %v406, 4
    %v408 = vrot.slane %v51, 5
    %v409 = vsel %vm393, %v407, %v408
    %v410 = vrot.slane %v52, 5
    %v411 = vrot.slane %v410, 4
    %v412 = vrot.slane %v53, 5
    %v413 = vsel %vm393, %v411, %v412
    %v414 = vrot.slane %v54, 5
    %v415 = vrot.slane %v414, 4
    %v416 = vrot.slane %v55, 5
    %v417 = vsel %vm393, %v415, %v416
    %v418 = vrot.slane %v56, 5
    %v419 = vrot.slane %v418, 4
    %v420 = vrot.slane %v57, 5
    %v421 = vsel %vm393, %v419, %v420
    %v422 = vrot.slane %v58, 5
    %v423 = vrot.slane %v422, 4
    %v424 = vrot.slane %v59, 5
    %v425 = vsel %vm393, %v423, %v424
    %s426 = scalar_lea.vmem [#allocation5], 16
    %v427 = vld [vmem:[%s426] sm:$0xf]
    %v428 = vld [vmem:[%s426 + $0x4] sm:$0xf]
    %v429 = vunpack.c.l.b16 %v397
    %v430 = vunpack.c.l.b16 %v401
    %v431 = vunpack.c.l.b16 %v405
    %v432 = vunpack.c.l.b16 %v409
    %v433 = vunpack.c.l.b16 %v413
    %v434 = vunpack.c.l.b16 %v417
    %v435 = vunpack.c.l.b16 %v421
    %v436 = vunpack.c.l.b16 %v425
    %v437 = vpack.c.b16 %v430, %v429
    %v438 = vpack.c.b16 %v432, %v431
    %v439 = vpack.c.b16 %v434, %v433
    %v440 = vpack.c.b16 %v436, %v435
    %v443 = vunpack.c.l.b16 %v427
    %v444 = vunpack.c.l.b16 %v428
    %v445 = vpack.c.b16 %v444, %v443
    %v448 = vsel %vm202, %v437, 0
    %v451 = vsel %vm202, %v438, 0
    %v454 = vsel %vm202, %v439, 0
    %v457 = vsel %vm202, %v440, 0
    %459 = vmatprep.subr.bf16.mxu0 0
    %460 = vmatpush1.bf16.msra.mxu0 %v445
    %461 = vmatprep.subr.bf16.mxu0 0
    %462 = vmatpush1.bf16.msra.mxu0 0
    %463 = vmatprep.subr.bf16.mxu0 0
    %464 = vmatpush1.bf16.msra.mxu0 0
    %465 = vmatprep.subr.bf16.mxu0 0
    %466 = vmatpush1.bf16.msra.mxu0 0
    %467 = vmatprep.subr.bf16.mxu0 0
    %468 = vmatpush1.bf16.msra.mxu0 0
    %469 = vmatprep.subr.bf16.mxu0 0
    %470 = vmatpush1.bf16.msra.mxu0 0
    %471 = vmatprep.subr.bf16.mxu0 0
    %472 = vmatpush1.bf16.msra.mxu0 0
    %473 = vmatprep.subr.bf16.mxu0 0
    %474 = vmatpush1.bf16.msra.mxu0 0
    %475 = vmatprep.subr.bf16.mxu0 0
    %476 = vmatpush1.bf16.msra.mxu0 0
    %477 = vmatprep.subr.bf16.mxu0 0
    %478 = vmatpush1.bf16.msra.mxu0 0
    %479 = vmatprep.subr.bf16.mxu0 0
    %480 = vmatpush1.bf16.msra.mxu0 0
    %481 = vmatprep.subr.bf16.mxu0 0
    %482 = vmatpush1.bf16.msra.mxu0 0
    %483 = vmatprep.subr.bf16.mxu0 0
    %484 = vmatpush1.bf16.msra.mxu0 0
    %485 = vmatprep.subr.bf16.mxu0 0
    %486 = vmatpush1.bf16.msra.mxu0 0
    %487 = vmatprep.subr.bf16.mxu0 0
    %488 = vmatpush1.bf16.msra.mxu0 0
    %489 = vmatprep.subr.bf16.mxu0 0
    %490 = vmatpush1.bf16.msra.mxu0 0
    %491 = vmatprep.mubr.bf16.mxu0 0
    %492 = vmatmul.mubr.bf16.gmra.mrb[0].mxu0 %v448
    %v493 = vpop.f32.mrb[0].mxu0
    %v494 = vadd.f32 0.0, %v493
    %v495 = vpop.f32.mrb[0].mxu0
    %v496 = vpop.f32.mrb[0].mxu0
    %v497 = vadd.f32 0.0, %v496
    %v498 = vpop.f32.mrb[0].mxu0
    %499 = vmatprep.mubr.bf16.mxu0 0
    %500 = vmatmul.mubr.bf16.gmra.mrb[0].mxu0 %v451
    %v501 = vpop.f32.mrb[0].mxu0
    %v502 = vadd.f32 0.0, %v501
    %v503 = vpop.f32.mrb[0].mxu0
    %v504 = vpop.f32.mrb[0].mxu0
    %v505 = vadd.f32 0.0, %v504
    %v506 = vpop.f32.mrb[0].mxu0
    %507 = vmatprep.mubr.bf16.mxu0 0
    %508 = vmatmul.mubr.bf16.gmra.mrb[0].mxu0 %v454
    %v509 = vpop.f32.mrb[0].mxu0
    %v510 = vadd.f32 0.0, %v509
    %v511 = vpop.f32.mrb[0].mxu0
    %v512 = vpop.f32.mrb[0].mxu0
    %v513 = vadd.f32 0.0, %v512
    %v514 = vpop.f32.mrb[0].mxu0
    %515 = vmatprep.mubr.bf16.mxu0 0
    %516 = vmatmul.mubr.bf16.gmra.mrb[0].mxu0 %v457
    %v517 = vpop.f32.mrb[0].mxu0
    %v518 = vadd.f32 0.0, %v517
    %v519 = vpop.f32.mrb[0].mxu0
    %v520 = vpop.f32.mrb[0].mxu0
    %v521 = vadd.f32 0.0, %v520
    %v522 = vpop.f32.mrb[0].mxu0
    %523 = vdwg.mxu0
    %v524 = vadd.f32 %v353, %v494
    %v525 = vadd.f32 %v356, %v497
    %v526 = vadd.f32 %v361, %v502
    %v527 = vadd.f32 %v364, %v505
    %v528 = vadd.f32 %v369, %v510
    %v529 = vadd.f32 %v372, %v513
    %v530 = vadd.f32 %v377, %v518
    %v531 = vadd.f32 %v380, %v521
    %s532 = scalar_lea.vmem [#allocation5], 24
    %v533 = vld [vmem:[%s532] sm:$0xf]
    %v534 = vld [vmem:[%s532 + $0x4] sm:$0xf]
    %v536 = vunpack.c.l.b16 %v60
    %v537 = vpack.c.b16 %v290, %v289
    %v538 = vpack.c.b16 %v292, %v291
    %v539 = vpack.c.b16 %v294, %v293
    %v540 = vpack.c.b16 %v536, %v295
    %v543 = vunpack.c.l.b16 %v533
    %v544 = vunpack.c.l.b16 %v534
    %v545 = vpack.c.b16 %v544, %v543
    %v548 = vsel %vm202, %v537, 0
    %v551 = vsel %vm202, %v538, 0
    %v554 = vsel %vm202, %v539, 0
    %v557 = vsel %vm202, %v540, 0
    %559 = vmatprep.subr.bf16.mxu0 0
    %560 = vmatpush1.bf16.msra.mxu0 %v545
    %561 = vmatprep.subr.bf16.mxu0 0
    %562 = vmatpush1.bf16.msra.mxu0 0
    %563 = vmatprep.subr.bf16.mxu0 0
    %564 = vmatpush1.bf16.msra.mxu0 0
    %565 = vmatprep.subr.bf16.mxu0 0
    %566 = vmatpush1.bf16.msra.mxu0 0
    %567 = vmatprep.subr.bf16.mxu0 0
    %568 = vmatpush1.bf16.msra.mxu0 0
    %569 = vmatprep.subr.bf16.mxu0 0
    %570 = vmatpush1.bf16.msra.mxu0 0
    %571 = vmatprep.subr.bf16.mxu0 0
    %572 = vmatpush1.bf16.msra.mxu0 0
    %573 = vmatprep.subr.bf16.mxu0 0
    %574 = vmatpush1.bf16.msra.mxu0 0
    %575 = vmatprep.subr.bf16.mxu0 0
    %576 = vmatpush1.bf16.msra.mxu0 0
    %577 = vmatprep.subr.bf16.mxu0 0
    %578 = vmatpush1.bf16.msra.mxu0 0
    %579 = vmatprep.subr.bf16.mxu0 0
    %580 = vmatpush1.bf16.msra.mxu0 0
    %581 = vmatprep.subr.bf16.mxu0 0
    %582 = vmatpush1.bf16.msra.mxu0 0
    %583 = vmatprep.subr.bf16.mxu0 0
    %584 = vmatpush1.bf16.msra.mxu0 0
    %585 = vmatprep.subr.bf16.mxu0 0
    %586 = vmatpush1.bf16.msra.mxu0 0
    %587 = vmatprep.subr.bf16.mxu0 0
    %588 = vmatpush1.bf16.msra.mxu0 0
    %589 = vmatprep.subr.bf16.mxu0 0
    %590 = vmatpush1.bf16.msra.mxu0 0
    %591 = vmatprep.mubr.bf16.mxu0 0
    %592 = vmatmul.mubr.bf16.gmra.mrb[0].mxu0 %v548
    %v593 = vpop.f32.mrb[0].mxu0
    %v594 = vadd.f32 0.0, %v593
    %v595 = vpop.f32.mrb[0].mxu0
    %v596 = vpop.f32.mrb[0].mxu0
    %v597 = vadd.f32 0.0, %v596
    %v598 = vpop.f32.mrb[0].mxu0
    %599 = vmatprep.mubr.bf16.mxu0 0
    %600 = vmatmul.mubr.bf16.gmra.mrb[0].mxu0 %v551
    %v601 = vpop.f32.mrb[0].mxu0
    %v602 = vadd.f32 0.0, %v601
    %v603 = vpop.f32.mrb[0].mxu0
    %v604 = vpop.f32.mrb[0].mxu0
    %v605 = vadd.f32 0.0, %v604
    %v606 = vpop.f32.mrb[0].mxu0
    %607 = vmatprep.mubr.bf16.mxu0 0
    %608 = vmatmul.mubr.bf16.gmra.mrb[0].mxu0 %v554
    %v609 = vpop.f32.mrb[0].mxu0
    %v610 = vadd.f32 0.0, %v609
    %v611 = vpop.f32.mrb[0].mxu0
    %v612 = vpop.f32.mrb[0].mxu0
    %v613 = vadd.f32 0.0, %v612
    %v614 = vpop.f32.mrb[0].mxu0
    %615 = vmatprep.mubr.bf16.mxu0 0
    %616 = vmatmul.mubr.bf16.gmra.mrb[0].mxu0 %v557
    %v617 = vpop.f32.mrb[0].mxu0
    %v618 = vadd.f32 0.0, %v617
    %v619 = vpop.f32.mrb[0].mxu0
    %v620 = vpop.f32.mrb[0].mxu0
    %v621 = vadd.f32 0.0, %v620
    %v622 = vpop.f32.mrb[0].mxu0
    %623 = vdwg.mxu0
    %v624 = vadd.f32 %v524, %v594
    %v625 = vadd.f32 %v525, %v597
    %v626 = vadd.f32 %v526, %v602
    %v627 = vadd.f32 %v527, %v605
    %v628 = vadd.f32 %v528, %v610
    %v629 = vadd.f32 %v529, %v613
    %v630 = vadd.f32 %v530, %v618
    %v631 = vadd.f32 %v531, %v621
    %v633 = vshrl.u32 %v60, 16
    %v635 = vrot.slane %v633, 4
    %v636 = vshll.u32 %v60, 16
    %v638 = vrot.slane %v636, 5
    %v639 = vor.u32 %v635, %v638
    %v640 = vrot.slane %v639, 4
    %v642 = vshll.u32 %v61, 16
    %v644 = vrot.slane %v642, 5
    %v645 = vsel %vm68, %v640, %v644
    %s646 = scalar_lea.vmem [#allocation5], 32
    %v647 = vld [vmem:[%s646] sm:$0xf]
    %v648 = vld [vmem:[%s646 + $0x4] sm:$0xf]
    %v649 = vunpack.c.l.b16 %v645
    %v650 = vpack.c.b16 %v186, %v185
    %v651 = vpack.c.b16 %v188, %v187
    %v652 = vpack.c.b16 %v190, %v189
    %v653 = vpack.c.b16 %v649, %v191
    %v656 = vunpack.c.l.b16 %v647
    %v657 = vunpack.c.l.b16 %v648
    %v658 = vpack.c.b16 %v657, %v656
    %v661 = vsel %vm202, %v650, 0
    %v664 = vsel %vm202, %v651, 0
    %v667 = vsel %vm202, %v652, 0
    %v670 = vsel %vm202, %v653, 0
    %672 = vmatprep.subr.bf16.mxu0 0
    %673 = vmatpush1.bf16.msra.mxu0 %v658
    %674 = vmatprep.subr.bf16.mxu0 0
    %675 = vmatpush1.bf16.msra.mxu0 0
    %676 = vmatprep.subr.bf16.mxu0 0
    %677 = vmatpush1.bf16.msra.mxu0 0
    %678 = vmatprep.subr.bf16.mxu0 0
    %679 = vmatpush1.bf16.msra.mxu0 0
    %680 = vmatprep.subr.bf16.mxu0 0
    %681 = vmatpush1.bf16.msra.mxu0 0
    %682 = vmatprep.subr.bf16.mxu0 0
    %683 = vmatpush1.bf16.msra.mxu0 0
    %684 = vmatprep.subr.bf16.mxu0 0
    %685 = vmatpush1.bf16.msra.mxu0 0
    %686 = vmatprep.subr.bf16.mxu0 0
    %687 = vmatpush1.bf16.msra.mxu0 0
    %688 = vmatprep.subr.bf16.mxu0 0
    %689 = vmatpush1.bf16.msra.mxu0 0
    %690 = vmatprep.subr.bf16.mxu0 0
    %691 = vmatpush1.bf16.msra.mxu0 0
    %692 = vmatprep.subr.bf16.mxu0 0
    %693 = vmatpush1.bf16.msra.mxu0 0
    %694 = vmatprep.subr.bf16.mxu0 0
    %695 = vmatpush1.bf16.msra.mxu0 0
    %696 = vmatprep.subr.bf16.mxu0 0
    %697 = vmatpush1.bf16.msra.mxu0 0
    %698 = vmatprep.subr.bf16.mxu0 0
    %699 = vmatpush1.bf16.msra.mxu0 0
    %700 = vmatprep.subr.bf16.mxu0 0
    %701 = vmatpush1.bf16.msra.mxu0 0
    %702 = vmatprep.subr.bf16.mxu0 0
    %703 = vmatpush1.bf16.msra.mxu0 0
    %704 = vmatprep.mubr.bf16.mxu0 0
    %705 = vmatmul.mubr.bf16.gmra.mrb[0].mxu0 %v661
    %v706 = vpop.f32.mrb[0].mxu0
    %v707 = vadd.f32 0.0, %v706
    %v708 = vpop.f32.mrb[0].mxu0
    %v709 = vpop.f32.mrb[0].mxu0
    %v710 = vadd.f32 0.0, %v709
    %v711 = vpop.f32.mrb[0].mxu0
    %712 = vmatprep.mubr.bf16.mxu0 0
    %713 = vmatmul.mubr.bf16.gmra.mrb[0].mxu0 %v664
    %v714 = vpop.f32.mrb[0].mxu0
    %v715 = vadd.f32 0.0, %v714
    %v716 = vpop.f32.mrb[0].mxu0
    %v717 = vpop.f32.mrb[0].mxu0
    %v718 = vadd.f32 0.0, %v717
    %v719 = vpop.f32.mrb[0].mxu0
    %720 = vmatprep.mubr.bf16.mxu0 0
    %721 = vmatmul.mubr.bf16.gmra.mrb[0].mxu0 %v667
    %v722 = vpop.f32.mrb[0].mxu0
    %v723 = vadd.f32 0.0, %v722
    %v724 = vpop.f32.mrb[0].mxu0
    %v725 = vpop.f32.mrb[0].mxu0
    %v726 = vadd.f32 0.0, %v725
    %v727 = vpop.f32.mrb[0].mxu0
    %728 = vmatprep.mubr.bf16.mxu0 0
    %729 = vmatmul.mubr.bf16.gmra.mrb[0].mxu0 %v670
    %v730 = vpop.f32.mrb[0].mxu0
    %v731 = vadd.f32 0.0, %v730
    %v732 = vpop.f32.mrb[0].mxu0
    %v733 = vpop.f32.mrb[0].mxu0
    %v734 = vadd.f32 0.0, %v733
    %v735 = vpop.f32.mrb[0].mxu0
    %736 = vdwg.mxu0
    %v737 = vadd.f32 %v624, %v707
    %v738 = vadd.f32 %v625, %v710
    %v739 = vadd.f32 %v626, %v715
    %v740 = vadd.f32 %v627, %v718
    %v741 = vadd.f32 %v628, %v723
    %v742 = vadd.f32 %v629, %v726
    %v743 = vadd.f32 %v630, %v731
    %v744 = vadd.f32 %v631, %v734
    %v746 = vrot.slane %v60, 5
    %v747 = vrot.slane %v746, 4
    %v748 = vrot.slane %v61, 5
    %v749 = vsel %vm393, %v747, %v748
    %s750 = scalar_lea.vmem [#allocation5], 40
    %v751 = vld [vmem:[%s750] sm:$0xf]
    %v752 = vld [vmem:[%s750 + $0x4] sm:$0xf]
    %v753 = vunpack.c.l.b16 %v749
    %v754 = vpack.c.b16 %v431, %v430
    %v755 = vpack.c.b16 %v433, %v432
    %v756 = vpack.c.b16 %v435, %v434
    %v757 = vpack.c.b16 %v753, %v436
    %v760 = vunpack.c.l.b16 %v751
    %v761 = vunpack.c.l.b16 %v752
    %v762 = vpack.c.b16 %v761, %v760
    %v765 = vsel %vm202, %v754, 0
    %v768 = vsel %vm202, %v755, 0
    %v771 = vsel %vm202, %v756, 0
    %v774 = vsel %vm202, %v757, 0
    %776 = vmatprep.subr.bf16.mxu0 0
    %777 = vmatpush1.bf16.msra.mxu0 %v762
    %778 = vmatprep.subr.bf16.mxu0 0
    %779 = vmatpush1.bf16.msra.mxu0 0
    %780 = vmatprep.subr.bf16.mxu0 0
    %781 = vmatpush1.bf16.msra.mxu0 0
    %782 = vmatprep.subr.bf16.mxu0 0
    %783 = vmatpush1.bf16.msra.mxu0 0
    %784 = vmatprep.subr.bf16.mxu0 0
    %785 = vmatpush1.bf16.msra.mxu0 0
    %786 = vmatprep.subr.bf16.mxu0 0
    %787 = vmatpush1.bf16.msra.mxu0 0
    %788 = vmatprep.subr.bf16.mxu0 0
    %789 = vmatpush1.bf16.msra.mxu0 0
    %790 = vmatprep.subr.bf16.mxu0 0
    %791 = vmatpush1.bf16.msra.mxu0 0
    %792 = vmatprep.subr.bf16.mxu0 0
    %793 = vmatpush1.bf16.msra.mxu0 0
    %794 = vmatprep.subr.bf16.mxu0 0
    %795 = vmatpush1.bf16.msra.mxu0 0
    %796 = vmatprep.subr.bf16.mxu0 0
    %797 = vmatpush1.bf16.msra.mxu0 0
    %798 = vmatprep.subr.bf16.mxu0 0
    %799 = vmatpush1.bf16.msra.mxu0 0
    %800 = vmatprep.subr.bf16.mxu0 0
    %801 = vmatpush1.bf16.msra.mxu0 0
    %802 = vmatprep.subr.bf16.mxu0 0
    %803 = vmatpush1.bf16.msra.mxu0 0
    %804 = vmatprep.subr.bf16.mxu0 0
    %805 = vmatpush1.bf16.msra.mxu0 0
    %806 = vmatprep.subr.bf16.mxu0 0
    %807 = vmatpush1.bf16.msra.mxu0 0
    %808 = vmatprep.mubr.bf16.mxu0 0
    %809 = vmatmul.mubr.bf16.gmra.mrb[0].mxu0 %v765
    %v810 = vpop.f32.mrb[0].mxu0
    %v811 = vadd.f32 0.0, %v810
    %v812 = vpop.f32.mrb[0].mxu0
    %v813 = vpop.f32.mrb[0].mxu0
    %v814 = vadd.f32 0.0, %v813
    %v815 = vpop.f32.mrb[0].mxu0
    %816 = vmatprep.mubr.bf16.mxu0 0
    %817 = vmatmul.mubr.bf16.gmra.mrb[0].mxu0 %v768
    %v818 = vpop.f32.mrb[0].mxu0
    %v819 = vadd.f32 0.0, %v818
    %v820 = vpop.f32.mrb[0].mxu0
    %v821 = vpop.f32.mrb[0].mxu0
    %v822 = vadd.f32 0.0, %v821
    %v823 = vpop.f32.mrb[0].mxu0
    %824 = vmatprep.mubr.bf16.mxu0 0
    %825 = vmatmul.mubr.bf16.gmra.mrb[0].mxu0 %v771
    %v826 = vpop.f32.mrb[0].mxu0
    %v827 = vadd.f32 0.0, %v826
    %v828 = vpop.f32.mrb[0].mxu0
    %v829 = vpop.f32.mrb[0].mxu0
    %v830 = vadd.f32 0.0, %v829
    %v831 = vpop.f32.mrb[0].mxu0
    %832 = vmatprep.mubr.bf16.mxu0 0
    %833 = vmatmul.mubr.bf16.gmra.mrb[0].mxu0 %v774
    %v834 = vpop.f32.mrb[0].mxu0
    %v835 = vadd.f32 0.0, %v834
    %v836 = vpop.f32.mrb[0].mxu0
    %v837 = vpop.f32.mrb[0].mxu0
    %v838 = vadd.f32 0.0, %v837
    %v839 = vpop.f32.mrb[0].mxu0
    %840 = vdwg.mxu0
    %v841 = vadd.f32 %v737, %v811
    %v842 = vadd.f32 %v738, %v814
    %v843 = vadd.f32 %v739, %v819
    %v844 = vadd.f32 %v740, %v822
    %v845 = vadd.f32 %v741, %v827
    %v846 = vadd.f32 %v742, %v830
    %v847 = vadd.f32 %v743, %v835
    %v848 = vadd.f32 %v744, %v838
    %s849 = scalar_lea.vmem [#allocation5], 48
    %v850 = vld [vmem:[%s849] sm:$0xf]
    %v851 = vld [vmem:[%s849 + $0x4] sm:$0xf]
    %v853 = vunpack.c.l.b16 %v62
    %v854 = vpack.c.b16 %v853, %v536
    %v857 = vunpack.c.l.b16 %v850
    %v858 = vunpack.c.l.b16 %v851
    %v859 = vpack.c.b16 %v858, %v857
    %v862 = vsel %vm202, %v854, 0
    %864 = vmatprep.subr.bf16.mxu0 0
    %865 = vmatpush1.bf16.msra.mxu0 %v859
    %866 = vmatprep.subr.bf16.mxu0 0
    %867 = vmatpush1.bf16.msra.mxu0 0
    %868 = vmatprep.subr.bf16.mxu0 0
    %869 = vmatpush1.bf16.msra.mxu0 0
    %870 = vmatprep.subr.bf16.mxu0 0
    %871 = vmatpush1.bf16.msra.mxu0 0
    %872 = vmatprep.subr.bf16.mxu0 0
    %873 = vmatpush1.bf16.msra.mxu0 0
    %874 = vmatprep.subr.bf16.mxu0 0
    %875 = vmatpush1.bf16.msra.mxu0 0
    %876 = vmatprep.subr.bf16.mxu0 0
    %877 = vmatpush1.bf16.msra.mxu0 0
    %878 = vmatprep.subr.bf16.mxu0 0
    %879 = vmatpush1.bf16.msra.mxu0 0
    %880 = vmatprep.subr.bf16.mxu0 0
    %881 = vmatpush1.bf16.msra.mxu0 0
    %882 = vmatprep.subr.bf16.mxu0 0
    %883 = vmatpush1.bf16.msra.mxu0 0
    %884 = vmatprep.subr.bf16.mxu0 0
    %885 = vmatpush1.bf16.msra.mxu0 0
    %886 = vmatprep.subr.bf16.mxu0 0
    %887 = vmatpush1.bf16.msra.mxu0 0
    %888 = vmatprep.subr.bf16.mxu0 0
    %889 = vmatpush1.bf16.msra.mxu0 0
    %890 = vmatprep.subr.bf16.mxu0 0
    %891 = vmatpush1.bf16.msra.mxu0 0
    %892 = vmatprep.subr.bf16.mxu0 0
    %893 = vmatpush1.bf16.msra.mxu0 0
    %894 = vmatprep.subr.bf16.mxu0 0
    %895 = vmatpush1.bf16.msra.mxu0 0
    %896 = vmatprep.mubr.bf16.mxu0 0
    %897 = vmatmul.mubr.bf16.gmra.mrb[0].mxu0 %v310
    %v898 = vpop.f32.mrb[0].mxu0
    %v899 = vadd.f32 0.0, %v898
    %v900 = vpop.f32.mrb[0].mxu0
    %v901 = vpop.f32.mrb[0].mxu0
    %v902 = vadd.f32 0.0, %v901
    %v903 = vpop.f32.mrb[0].mxu0
    %904 = vmatprep.mubr.bf16.mxu0 0
    %905 = vmatmul.mubr.bf16.gmra.mrb[0].mxu0 %v313
    %v906 = vpop.f32.mrb[0].mxu0
    %v907 = vadd.f32 0.0, %v906
    %v908 = vpop.f32.mrb[0].mxu0
    %v909 = vpop.f32.mrb[0].mxu0
    %v910 = vadd.f32 0.0, %v909
    %v911 = vpop.f32.mrb[0].mxu0
    %912 = vmatprep.mubr.bf16.mxu0 0
    %913 = vmatmul.mubr.bf16.gmra.mrb[0].mxu0 %v316
    %v914 = vpop.f32.mrb[0].mxu0
    %v915 = vadd.f32 0.0, %v914
    %v916 = vpop.f32.mrb[0].mxu0
    %v917 = vpop.f32.mrb[0].mxu0
    %v918 = vadd.f32 0.0, %v917
    %v919 = vpop.f32.mrb[0].mxu0
    %920 = vmatprep.mubr.bf16.mxu0 0
    %921 = vmatmul.mubr.bf16.gmra.mrb[0].mxu0 %v862
    %v922 = vpop.f32.mrb[0].mxu0
    %v923 = vadd.f32 0.0, %v922
    %v924 = vpop.f32.mrb[0].mxu0
    %v925 = vpop.f32.mrb[0].mxu0
    %v926 = vadd.f32 0.0, %v925
    %v927 = vpop.f32.mrb[0].mxu0
    %928 = vdwg.mxu0
    %v929 = vadd.f32 %v841, %v899
    %v930 = vadd.f32 %v842, %v902
    %v931 = vadd.f32 %v843, %v907
    %v932 = vadd.f32 %v844, %v910
    %v933 = vadd.f32 %v845, %v915
    %v934 = vadd.f32 %v846, %v918
    %v935 = vadd.f32 %v847, %v923
    %v936 = vadd.f32 %v848, %v926
    %v938 = vshrl.u32 %v62, 16
    %v940 = vrot.slane %v938, 4
    %v941 = vshll.u32 %v62, 16
    %v943 = vrot.slane %v941, 5
    %v944 = vor.u32 %v940, %v943
    %v945 = vrot.slane %v944, 4
    %v947 = vshll.u32 %v63, 16
    %v949 = vrot.slane %v947, 5
    %v950 = vsel %vm68, %v945, %v949
    %s951 = scalar_lea.vmem [#allocation5], 56
    %v952 = vld [vmem:[%s951] sm:$0xf]
    %v953 = vld [vmem:[%s951 + $0x4] sm:$0xf]
    %v954 = vunpack.c.l.b16 %v950
    %v955 = vpack.c.b16 %v954, %v649
    %v958 = vunpack.c.l.b16 %v952
    %v959 = vunpack.c.l.b16 %v953
    %v960 = vpack.c.b16 %v959, %v958
    %v963 = vsel %vm202, %v955, 0
    %965 = vmatprep.subr.bf16.mxu0 0
    %966 = vmatpush1.bf16.msra.mxu0 %v960
    %967 = vmatprep.subr.bf16.mxu0 0
    %968 = vmatpush1.bf16.msra.mxu0 0
    %969 = vmatprep.subr.bf16.mxu0 0
    %970 = vmatpush1.bf16.msra.mxu0 0
    %971 = vmatprep.subr.bf16.mxu0 0
    %972 = vmatpush1.bf16.msra.mxu0 0
    %973 = vmatprep.subr.bf16.mxu0 0
    %974 = vmatpush1.bf16.msra.mxu0 0
    %975 = vmatprep.subr.bf16.mxu0 0
    %976 = vmatpush1.bf16.msra.mxu0 0
    %977 = vmatprep.subr.bf16.mxu0 0
    %978 = vmatpush1.bf16.msra.mxu0 0
    %979 = vmatprep.subr.bf16.mxu0 0
    %980 = vmatpush1.bf16.msra.mxu0 0
    %981 = vmatprep.subr.bf16.mxu0 0
    %982 = vmatpush1.bf16.msra.mxu0 0
    %983 = vmatprep.subr.bf16.mxu0 0
    %984 = vmatpush1.bf16.msra.mxu0 0
    %985 = vmatprep.subr.bf16.mxu0 0
    %986 = vmatpush1.bf16.msra.mxu0 0
    %987 = vmatprep.subr.bf16.mxu0 0
    %988 = vmatpush1.bf16.msra.mxu0 0
    %989 = vmatprep.subr.bf16.mxu0 0
    %990 = vmatpush1.bf16.msra.mxu0 0
    %991 = vmatprep.subr.bf16.mxu0 0
    %992 = vmatpush1.bf16.msra.mxu0 0
    %993 = vmatprep.subr.bf16.mxu0 0
    %994 = vmatpush1.bf16.msra.mxu0 0
    %995 = vmatprep.subr.bf16.mxu0 0
    %996 = vmatpush1.bf16.msra.mxu0 0
    %997 = vmatprep.mubr.bf16.mxu0 0
    %998 = vmatmul.mubr.bf16.gmra.mrb[0].mxu0 %v207
    %v999 = vpop.f32.mrb[0].mxu0
    %v1000 = vadd.f32 0.0, %v999
    %v1001 = vpop.f32.mrb[0].mxu0
    %v1002 = vpop.f32.mrb[0].mxu0
    %v1003 = vadd.f32 0.0, %v1002
    %v1004 = vpop.f32.mrb[0].mxu0
    %1005 = vmatprep.mubr.bf16.mxu0 0
    %1006 = vmatmul.mubr.bf16.gmra.mrb[0].mxu0 %v210
    %v1007 = vpop.f32.mrb[0].mxu0
    %v1008 = vadd.f32 0.0, %v1007
    %v1009 = vpop.f32.mrb[0].mxu0
    %v1010 = vpop.f32.mrb[0].mxu0
    %v1011 = vadd.f32 0.0, %v1010
    %v1012 = vpop.f32.mrb[0].mxu0
    %1013 = vmatprep.mubr.bf16.mxu0 0
    %1014 = vmatmul.mubr.bf16.gmra.mrb[0].mxu0 %v213
    %v1015 = vpop.f32.mrb[0].mxu0
    %v1016 = vadd.f32 0.0, %v1015
    %v1017 = vpop.f32.mrb[0].mxu0
    %v1018 = vpop.f32.mrb[0].mxu0
    %v1019 = vadd.f32 0.0, %v1018
    %v1020 = vpop.f32.mrb[0].mxu0
    %1021 = vmatprep.mubr.bf16.mxu0 0
    %1022 = vmatmul.mubr.bf16.gmra.mrb[0].mxu0 %v963
    %v1023 = vpop.f32.mrb[0].mxu0
    %v1024 = vadd.f32 0.0, %v1023
    %v1025 = vpop.f32.mrb[0].mxu0
    %v1026 = vpop.f32.mrb[0].mxu0
    %v1027 = vadd.f32 0.0, %v1026
    %v1028 = vpop.f32.mrb[0].mxu0
    %1029 = vdwg.mxu0
    %v1030 = vadd.f32 %v929, %v1000
    %v1031 = vadd.f32 %v930, %v1003
    %v1032 = vadd.f32 %v931, %v1008
    %v1033 = vadd.f32 %v932, %v1011
    %v1034 = vadd.f32 %v933, %v1016
    %v1035 = vadd.f32 %v934, %v1019
    %v1036 = vadd.f32 %v935, %v1024
    %v1037 = vadd.f32 %v936, %v1027
    %v1039 = vrot.slane %v62, 5
    %v1040 = vrot.slane %v1039, 4
    %v1041 = vrot.slane %v63, 5
    %v1042 = vsel %vm393, %v1040, %v1041
    %s1043 = scalar_lea.vmem [#allocation5], 64
    %v1044 = vld [vmem:[%s1043] sm:$0xf]
    %v1045 = vld [vmem:[%s1043 + $0x4] sm:$0xf]
    %v1046 = vunpack.c.l.b16 %v1042
    %v1047 = vpack.c.b16 %v1046, %v753
    %v1050 = vunpack.c.l.b16 %v1044
    %v1051 = vunpack.c.l.b16 %v1045
    %v1052 = vpack.c.b16 %v1051, %v1050
    %v1055 = vsel %vm202, %v1047, 0
    %1057 = vmatprep.subr.bf16.mxu0 0
    %1058 = vmatpush1.bf16.msra.mxu0 %v1052
    %1059 = vmatprep.subr.bf16.mxu0 0
    %1060 = vmatpush1.bf16.msra.mxu0 0
    %1061 = vmatprep.subr.bf16.mxu0 0
    %1062 = vmatpush1.bf16.msra.mxu0 0
    %1063 = vmatprep.subr.bf16.mxu0 0
    %1064 = vmatpush1.bf16.msra.mxu0 0
    %1065 = vmatprep.subr.bf16.mxu0 0
    %1066 = vmatpush1.bf16.msra.mxu0 0
    %1067 = vmatprep.subr.bf16.mxu0 0
    %1068 = vmatpush1.bf16.msra.mxu0 0
    %1069 = vmatprep.subr.bf16.mxu0 0
    %1070 = vmatpush1.bf16.msra.mxu0 0
    %1071 = vmatprep.subr.bf16.mxu0 0
    %1072 = vmatpush1.bf16.msra.mxu0 0
    %1073 = vmatprep.subr.bf16.mxu0 0
    %1074 = vmatpush1.bf16.msra.mxu0 0
    %1075 = vmatprep.subr.bf16.mxu0 0
    %1076 = vmatpush1.bf16.msra.mxu0 0
    %1077 = vmatprep.subr.bf16.mxu0 0
    %1078 = vmatpush1.bf16.msra.mxu0 0
    %1079 = vmatprep.subr.bf16.mxu0 0
    %1080 = vmatpush1.bf16.msra.mxu0 0
    %1081 = vmatprep.subr.bf16.mxu0 0
    %1082 = vmatpush1.bf16.msra.mxu0 0
    %1083 = vmatprep.subr.bf16.mxu0 0
    %1084 = vmatpush1.bf16.msra.mxu0 0
    %1085 = vmatprep.subr.bf16.mxu0 0
    %1086 = vmatpush1.bf16.msra.mxu0 0
    %1087 = vmatprep.subr.bf16.mxu0 0
    %1088 = vmatpush1.bf16.msra.mxu0 0
    %1089 = vmatprep.mubr.bf16.mxu0 0
    %1090 = vmatmul.mubr.bf16.gmra.mrb[0].mxu0 %v451
    %v1091 = vpop.f32.mrb[0].mxu0
    %v1092 = vadd.f32 0.0, %v1091
    %v1093 = vpop.f32.mrb[0].mxu0
    %v1094 = vpop.f32.mrb[0].mxu0
    %v1095 = vadd.f32 0.0, %v1094
    %v1096 = vpop.f32.mrb[0].mxu0
    %1097 = vmatprep.mubr.bf16.mxu0 0
    %1098 = vmatmul.mubr.bf16.gmra.mrb[0].mxu0 %v454
    %v1099 = vpop.f32.mrb[0].mxu0
    %v1100 = vadd.f32 0.0, %v1099
    %v1101 = vpop.f32.mrb[0].mxu0
    %v1102 = vpop.f32.mrb[0].mxu0
    %v1103 = vadd.f32 0.0, %v1102
    %v1104 = vpop.f32.mrb[0].mxu0
    %1105 = vmatprep.mubr.bf16.mxu0 0
    %1106 = vmatmul.mubr.bf16.gmra.mrb[0].mxu0 %v457
    %v1107 = vpop.f32.mrb[0].mxu0
    %v1108 = vadd.f32 0.0, %v1107
    %v1109 = vpop.f32.mrb[0].mxu0
    %v1110 = vpop.f32.mrb[0].mxu0
    %v1111 = vadd.f32 0.0, %v1110
    %v1112 = vpop.f32.mrb[0].mxu0
    %1113 = vmatprep.mubr.bf16.mxu0 0
    %1114 = vmatmul.mubr.bf16.gmra.mrb[0].mxu0 %v1055
    %v1115 = vpop.f32.mrb[0].mxu0
    %v1116 = vadd.f32 0.0, %v1115
    %v1117 = vpop.f32.mrb[0].mxu0
    %v1118 = vpop.f32.mrb[0].mxu0
    %v1119 = vadd.f32 0.0, %v1118
    %v1120 = vpop.f32.mrb[0].mxu0
    %1121 = vdwg.mxu0
    %v1122 = vadd.f32 %v1030, %v1092
    %v1123 = vadd.f32 %v1031, %v1095
    %v1124 = vadd.f32 %v1032, %v1100
    %v1125 = vadd.f32 %v1033, %v1103
    %v1126 = vadd.f32 %v1034, %v1108
    %v1127 = vadd.f32 %v1035, %v1111
    %v1128 = vadd.f32 %v1036, %v1116
    %v1129 = vadd.f32 %v1037, %v1119
    %v1130 = vld [vmem:[%s2] sm:$0x1]
    %v1132 = vlaneseq
    %v1133 = vshrl.u32 %v1132, 7
    %v1134 = vsub.s32 0, %v1133
    %v1135 = vrot.slane %v1130, %v1134
    %v1137 = vadd.f32 %v1122, %v1135
    %v1138 = vadd.f32 %v1123, %v1135
    %v1139 = vadd.f32 %v1124, %v1135
    %v1140 = vadd.f32 %v1125, %v1135
    %v1141 = vadd.f32 %v1126, %v1135
    %v1142 = vadd.f32 %v1127, %v1135
    %v1143 = vadd.f32 %v1128, %v1135
    %v1144 = vadd.f32 %v1129, %v1135
    %v1145 = vmax.f32 %v1137, 0.0
    %v1146 = vmax.f32 %v1138, 0.0
    %v1147 = vmax.f32 %v1139, 0.0
    %v1148 = vmax.f32 %v1140, 0.0
    %v1149 = vmax.f32 %v1141, 0.0
    %v1150 = vmax.f32 %v1142, 0.0
    %v1151 = vmax.f32 %v1143, 0.0
    %v1152 = vmax.f32 %v1144, 0.0
    %1153 = vst [vmem:[#allocation7] sm:$0xff] %v1145
    %1154 = vst [vmem:[#allocation7 + $0x8] sm:$0xff] %v1146
    %1155 = vst [vmem:[#allocation7 + $0x10] sm:$0xff] %v1147
    %1156 = vst [vmem:[#allocation7 + $0x18] sm:$0xff] %v1148
    %1157 = vst [vmem:[#allocation7 + $0x20] sm:$0xff] %v1149
    %1158 = vst [vmem:[#allocation7 + $0x28] sm:$0xff] %v1150
    %1159 = vst [vmem:[#allocation7 + $0x30] sm:$0xff] %v1151
    %1160 = vst [vmem:[#allocation7 + $0x38] sm:$0xff] %v1152
    // Predicated region
    $region22: #{tpu_custom_call.1} parent=1 // pred_check
      _
    $region23: #{tpu_custom_call.1} parent=1 // pred_check_branch
      %1162 = sbr.rel (0) target = $region25
    $region24: #{tpu_custom_call.1} parent=1 // pred_region
      %s1164 = ssub.s32 1024, 1024
      %1165 = vsyncadd [#allocation4], %s1164
      %s1166 = sshll.u32 [#allocation7], 4
      %s1167 = int_to_ptr.vmem [resolvable:$true] %s1166
      %1172 = dma.vmem_to_hbm [thread:$0]  %s1167, 1024, %s3, [#allocation4], 128, 128, 8
    $region25: #{tpu_custom_call.1} parent=1 // pred_fallthru
      _
    // Predicated region
    $region26: #{tpu_custom_call.1} parent=1 // pred_check
      _
    $region27: #{tpu_custom_call.1} parent=1 // pred_check_branch
      %1174 = sbr.rel (0) target = $region29
    $region28: #{tpu_custom_call.1} parent=1 // pred_region
      %1175 = dma.done [#allocation4], 1024
    $region29: #{tpu_custom_call.1} parent=1 // pred_fallthru
      _
    %1176 = vsyncpa [#allocation3], 1
    %1177 = vsyncpa [#allocation6], 1
    %1178 = vsyncpa [#allocation4], 1

</llo_original>
